<compile_context>
chip_gen: v5e
topology: v5e:2x2
jax: 0.10.0
libtpu: 0.0.40
codegen_flags: <defaults>
</compile_context>

<pallas_src>
import functools
import math

import jax
import jax.numpy as jnp
from jax.experimental import pallas as pl
from jax.experimental.pallas import tpu as pltpu

POS_HIDDEN = 32            # PositionalEncodingFourier hidden_dim
POS_TEMPERATURE = 10000.0
BN_EPS = 1e-5
MLP_ROW_CHUNK = 512        # rows per pwconv1/pwconv2 chunk (bounds the (rows, 4C) live set)
VMEM_LIMIT = 32 * 1024 * 1024   # explicit scoped-VMEM budget (safe on v5e/v6e/v7x)


# ----------------------------------------------------------------------------
# BlockSpec helpers
# ----------------------------------------------------------------------------
def _make_buffered1():
    """pl.Buffered(1) for grid-invariant inputs, if this Pallas has pipeline_mode."""
    if not hasattr(pl, "Buffered"):
        return None
    try:
        pl.BlockSpec((8, 128), lambda i: (0, 0), pipeline_mode=pl.Buffered(1))
        return pl.Buffered(1)
    except Exception:
        return None


_BUFFERED1 = _make_buffered1()


def fixed_spec(arr):
    """Spec for a batch-invariant input: full block, single-buffered when supported."""
    nd = arr.ndim

    def idx(g):
        return (0,) * nd

    if _BUFFERED1 is not None:
        return pl.BlockSpec(arr.shape, idx, pipeline_mode=_BUFFERED1)
    return pl.BlockSpec(arr.shape, idx)


# ----------------------------------------------------------------------------
# Kernel A: depthwise 3x3 conv (padding=1, groups=channels), lane-dense layout,
#           with the multi-scale residual add and the halo padding fused in-kernel.
# ----------------------------------------------------------------------------
def _dwconv_kernel(*refs, H, W, Cw, fuse_add):
    if fuse_add:
        x_ref, add_ref, w_ref, b_ref, o_ref = refs
    else:
        x_ref, w_ref, b_ref, o_ref = refs
    WC = W * Cw

    x = x_ref[0]                                            # (H, W*Cw) f32, lane-dense
    if fuse_add:
        x = x + add_ref[0]                                  # fused `sp = sp + spx[i]`

    # 1-pixel halo built in VMEM (no HBM pad round trip)
    zrow = jnp.zeros((1, WC), jnp.float32)
    xv = jnp.concatenate([zrow, x, zrow], axis=0)           # (H+2, W*Cw), rows padded
    zcol = jnp.zeros((H + 2, Cw), jnp.float32)
    # the three kw tap windows, built once (aligned slices + concat, no per-tap shifts)
    win = (jnp.concatenate([zcol, xv[:, :WC - Cw]], axis=1),    # kw=0 (left neighbour)
           xv,                                                   # kw=1 (centre)
           jnp.concatenate([xv[:, Cw:], zcol], axis=1))          # kw=2 (right neighbour)

    acc = jnp.zeros((H, WC), jnp.float32)
    for kh in range(3):
        for kw in range(3):
            tap = w_ref[kh * 3 + kw:kh * 3 + kw + 1, :]          # (1, W*Cw)
            acc = acc + win[kw][kh:kh + H, :] * tap
    o_ref[0] = acc + b_ref[...]                              # (8,128)-dense store


def dwconv3x3(x_main, x_add, w9, bias, *, H, W):
    """Depthwise 3x3 conv on lane-dense (B, H, W*Cw) images.

    x_add (same layout, or None) is added to x_main before the conv (the fused
    residual of the multi-scale chain).
    """
    # NOTE: for production Cw >= 128 prefer an (H+2, W+2, Cw) block with C on lanes
    # so the kw shift becomes a sublane (second-to-last dim) slice.
    B = x_main.shape[0]
    Cw = w9.shape[1]
    WC = W * Cw
    w_flat = jnp.tile(w9, (1, W))                            # lane w*Cw+c -> w9[., c]
    b_flat = jnp.tile(bias, (1, W))

    args = [x_main]
    in_specs = [pl.BlockSpec((1, H, WC), lambda b: (b, 0, 0))]
    if x_add is not None:
        args.append(x_add)
        in_specs.append(pl.BlockSpec((1, H, WC), lambda b: (b, 0, 0)))
    args += [w_flat, b_flat]
    in_specs += [fixed_spec(w_flat), fixed_spec(b_flat)]

    return pl.pallas_call(
        functools.partial(_dwconv_kernel, H=H, W=W, Cw=Cw, fuse_add=x_add is not None),
        out_shape=jax.ShapeDtypeStruct((B, H, WC), jnp.float32),
        grid=(B,),
        in_specs=in_specs,
        out_specs=pl.BlockSpec((1, H, WC), lambda b: (b, 0, 0)),
        compiler_params=pltpu.CompilerParams(
            dimension_semantics=("parallel",), vmem_limit_bytes=VMEM_LIMIT),
    )(*args)


# ----------------------------------------------------------------------------
# Kernel B: fused  (channel re-assembly) + norm_xca + pos + XCA + residual
#                  + norm + pwconv1 + Hardswish + pwconv2 + gamma + outer residual
#           over a whole batch block per grid step.
# ----------------------------------------------------------------------------
def _encoder_kernel(*refs, n_conv, num_heads, mlp_chunk):
    conv_refs = refs[:n_conv]
    (xin_ref, pos_ref, bnx_s_ref, bnx_b_ref, wqkv_ref, bqkv_ref, temp_ref,
     wproj_ref, bproj_ref, gxca_ref, bn_s_ref, bn_b_ref, w1_ref, b1_ref,
     w2_ref, b2_ref, gamma_ref, o_ref) = refs[n_conv:]

    f32, bf16 = jnp.float32, jnp.bfloat16
    Bb, N, C = xin_ref.shape
    hd = C // num_heads
    conv_ch = sum(int(r.shape[-1]) for r in conv_refs)

    xin = xin_ref[...]                                       # (Bb, N, C) original tokens
    # channel re-assembly: depthwise-conv'd channels + untouched tail (in-kernel)
    pieces = [r[...] for r in conv_refs] + [xin[..., conv_ch:]]
    x_cat = jnp.concatenate(pieces, axis=-1)                 # (Bb, N, C)

    # norm_xca (inference BN fold) then add the positional encoding
    x1 = x_cat * bnx_s_ref[...] + bnx_b_ref[...] + pos_ref[...]

    # ---- XCA on the flattened (Bb*N, C) slab (MXU M = Bb*N), bf16 operands ----
    x1_2d = x1.reshape(Bb * N, C)
    qkv = jnp.dot(x1_2d.astype(bf16), wqkv_ref[...],
                  preferred_element_type=f32) + bqkv_ref[...]          # (Bb*N, 3C)
    q = qkv[:, :C].reshape(Bb, N, C)
    k = qkv[:, C:2 * C].reshape(Bb, N, C)
    v = qkv[:, 2 * C:].reshape(Bb, N, C)

    def tok_normalize(t):            # F.normalize over tokens, per (image, channel)
        ssq = jnp.sum(t * t, axis=1, keepdims=True)
        return t * jax.lax.rsqrt(jnp.maximum(ssq, 1e-24))

    qn = tok_normalize(q).astype(bf16)
    kn = tok_normalize(k).astype(bf16)

    # all heads at once: (C, C) cross-covariance + block-diagonal masked softmax;
    # mask generated in-kernel (free VPU filler, no (C,C) HBM table)
    s = jnp.einsum('bnd,bne->bde', qn, kn, preferred_element_type=f32)  # (Bb, C, C)
    row_h = jax.lax.broadcasted_iota(jnp.int32, (C, C), 0) // hd
    col_h = jax.lax.broadcasted_iota(jnp.int32, (C, C), 1) // hd
    mask = jnp.where(row_h == col_h, 0.0, -1e30).astype(f32)
    s = s * temp_ref[...] + mask                            # per-row-head temperature
    s = s - jnp.max(s, axis=-1, keepdims=True)
    p_attn = jnp.exp(s)
    p_attn = p_attn * pl.reciprocal(jnp.sum(p_attn, axis=-1, keepdims=True),
                                    approx=True)            # off-block entries are 0

    xo = jnp.einsum('bne,bde->bnd', v.astype(bf16), p_attn.astype(bf16),
                    preferred_element_type=f32)             # (Bb, N, C)
    y = jnp.dot(xo.reshape(Bb * N, C).astype(bf16), wproj_ref[...],
                preferred_element_type=f32) + bproj_ref[...]
    x2 = x1_2d + gxca_ref[...] * y                          # residual around XCA

    # ---- norm (BN fold) -> pwconv1 -> Hardswish -> pwconv2 -> gamma -> + input ----
    # chunked over rows to bound the (rows, 4C) live range (v7x 64 MiB VMEM)
    xin_2d = xin.reshape(Bb * N, C)
    rows = Bb * N
    step = min(mlp_chunk, rows)
    for r0 in range(0, rows, step):
        sz = min(step, rows - r0)
        xm = x2[r0:r0 + sz] * bn_s_ref[...] + bn_b_ref[...]
        h = jnp.dot(xm.astype(bf16), w1_ref[...],
                    preferred_element_type=f32) + b1_ref[...]
        h = h * jnp.clip(h + 3.0, 0.0, 6.0) * (1.0 / 6.0)    # Hardswish
        y2 = jnp.dot(h.astype(bf16), w2_ref[...],
                     preferred_element_type=f32) + b2_ref[...]
        o_ref[r0:r0 + sz, :] = xin_2d[r0:r0 + sz] + gamma_ref[...] * y2


def fused_encoder(conv_tok, xin_tok, pos_embed, temp_row, p, *, num_heads, b_blk=None):
    """One fused kernel per batch block; returns flattened (B*N, C) tokens."""
    B, N, C = xin_tok.shape
    if b_blk is None:
        b_blk = B                     # fold the whole batch into one grid step
    assert B % b_blk == 0 and (b_blk * N) % 8 == 0
    n_conv = len(conv_tok)

    def batch_spec(arr):
        ch = arr.shape[-1]
        return pl.BlockSpec((b_blk, N, ch), lambda g: (g, 0, 0))

    fixed_args = (pos_embed, p['bnx_s'], p['bnx_b'], p['w_qkv_t'], p['b_qkv'],
                  temp_row, p['w_proj_t'], p['b_proj'], p['gamma_xca'],
                  p['bn_s'], p['bn_b'], p['w1_t'], p['b1'], p['w2_t'],
                  p['b2'], p['gamma'])
    in_specs = ([batch_spec(c) for c in conv_tok] + [batch_spec(xin_tok)]
                + [fixed_spec(a) for a in fixed_args])

    return pl.pallas_call(
        functools.partial(_encoder_kernel, n_conv=n_conv, num_heads=num_heads,
                          mlp_chunk=MLP_ROW_CHUNK),
        out_shape=jax.ShapeDtypeStruct((B * N, C), jnp.float32),
        grid=(B // b_blk,),
        in_specs=in_specs,
        out_specs=pl.BlockSpec((b_blk * N, C), lambda g: (g, 0)),
        compiler_params=pltpu.CompilerParams(
            dimension_semantics=("parallel",), vmem_limit_bytes=VMEM_LIMIT),
    )(*conv_tok, xin_tok, *fixed_args)


# ----------------------------------------------------------------------------
# Plain-JAX glue: Fourier positional features, parameters, full forward
# ----------------------------------------------------------------------------
def pos_features(H, W):
    scale = 2.0 * math.pi
    eps = 1e-6
    y_embed = jnp.broadcast_to(jnp.arange(1, H + 1, dtype=jnp.float32)[:, None], (H, W))
    x_embed = jnp.broadcast_to(jnp.arange(1, W + 1, dtype=jnp.float32)[None, :], (H, W))
    y_embed = y_embed / (float(H) + eps) * scale
    x_embed = x_embed / (float(W) + eps) * scale
    d = jnp.arange(POS_HIDDEN, dtype=jnp.float32)
    dim_t = POS_TEMPERATURE ** (2.0 * jnp.floor(d / 2.0) / POS_HIDDEN)
    pos_x = x_embed[:, :, None] / dim_t
    pos_y = y_embed[:, :, None] / dim_t
    pos_x = jnp.stack((jnp.sin(pos_x[:, :, 0::2]),
                       jnp.cos(pos_x[:, :, 1::2])), axis=3).reshape(H, W, POS_HIDDEN)
    pos_y = jnp.stack((jnp.sin(pos_y[:, :, 0::2]),
                       jnp.cos(pos_y[:, :, 1::2])), axis=3).reshape(H, W, POS_HIDDEN)
    pos = jnp.concatenate((pos_y, pos_x), axis=2)            # (H, W, 64)
    return pos.reshape(H * W, 2 * POS_HIDDEN).astype(jnp.float32)


def init_params(key, dim, *, expan_ratio=4, num_heads=8, scales=2,
                layer_scale_init_value=1e-6, w_std=0.02):
    width = max(int(math.ceil(dim / scales)), int(math.floor(dim // scales)))
    nums = 1 if scales == 1 else scales - 1
    keys = iter(jax.random.split(key, 64))

    def nrm(shape, dtype=jnp.float32):
        return (w_std * jax.random.normal(next(keys), shape)).astype(dtype)

    def bn_fold(C):
        g = 1.0 + 0.1 * jax.random.normal(next(keys), (C,))
        b = 0.1 * jax.random.normal(next(keys), (C,))
        m = 0.1 * jax.random.normal(next(keys), (C,))
        v = 1.0 + 0.1 * jax.random.uniform(next(keys), (C,))
        s = g / jnp.sqrt(v + BN_EPS)
        return (s.reshape(1, C).astype(jnp.float32),
                (b - m * s).reshape(1, C).astype(jnp.float32))

    bf16 = jnp.bfloat16
    p = dict(width=width, nums=nums)
    p['conv_w'] = [nrm((9, width)) for _ in range(nums)]      # [kh*3+kw, c], f32
    p['conv_b'] = [nrm((1, width)) for _ in range(nums)]
    p['bnx_s'], p['bnx_b'] = bn_fold(dim)                     # norm_xca (folded)
    p['w_pos_t'] = nrm((2 * POS_HIDDEN, dim))                 # 1x1 conv, (in, out)
    p['b_pos'] = nrm((1, dim))
    p['w_qkv_t'] = nrm((dim, 3 * dim), dtype=bf16)            # pre-transposed, bf16
    p['b_qkv'] = nrm((1, 3 * dim))
    p['temp'] = (1.0 + 0.1 * jax.random.uniform(next(keys), (num_heads,))
                 ).astype(jnp.float32)                         # XCA temperature
    p['w_proj_t'] = nrm((dim, dim), dtype=bf16)
    p['b_proj'] = nrm((1, dim))
    p['gamma_xca'] = jnp.full((1, dim), layer_scale_init_value, jnp.float32)
    p['bn_s'], p['bn_b'] = bn_fold(dim)                       # norm (folded)
    p['w1_t'] = nrm((dim, expan_ratio * dim), dtype=bf16)
    p['b1'] = nrm((1, expan_ratio * dim))
    p['w2_t'] = nrm((expan_ratio * dim, dim), dtype=bf16)
    p['b2'] = nrm((1, dim))
    p['gamma'] = jnp.full((1, dim), layer_scale_init_value, jnp.float32)
    return p


def sdta_encoder_bn_hs(x_nchw, p, *, num_heads=8):
    B, C, H, W = x_nchw.shape
    N = H * W
    width, nums = p['width'], p['nums']
    x_nhwc = jnp.transpose(x_nchw, (0, 2, 3, 1)).astype(jnp.float32)
    xin_tok = x_nhwc.reshape(B, N, C)

    # multi-scale depthwise conv chain (kernel A); residual add fused in-kernel
    conv_tok = []
    sp = None
    for i in range(nums):
        split_i = x_nhwc[..., i * width:(i + 1) * width].reshape(B, H, W * width)
        sp = dwconv3x3(split_i, sp, p['conv_w'][i], p['conv_b'][i], H=H, W=W)
        conv_tok.append(sp.reshape(B, N, width))               # free reshape

    # batch-invariant precomputation (hoisted out of the kernel)
    pos_embed = (pos_features(H, W) @ p['w_pos_t'] + p['b_pos']).astype(jnp.float32)
    hd = C // num_heads
    temp_row = jnp.repeat(p['temp'], hd)[:, None].astype(jnp.float32)   # (C, 1)

    out_flat = fused_encoder(conv_tok, xin_tok, pos_embed, temp_row, p,
                             num_heads=num_heads)
    return jnp.transpose(out_flat.reshape(B, H, W, C), (0, 3, 1, 2))


# ----------------------------------------------------------------------------
# Pure-JAX reference (torch-faithful op order, mirrors the kernel's bf16 cast points)
# ----------------------------------------------------------------------------
def reference_forward(x_nchw, p, *, num_heads=8):
    f32, bf16 = jnp.float32, jnp.bfloat16
    B, C, H, W = x_nchw.shape
    N = H * W
    width, nums = p['width'], p['nums']
    hd = C // num_heads
    inp = x_nchw.astype(f32)
    x_nhwc = jnp.transpose(inp, (0, 2, 3, 1))

    spx = [x_nhwc[..., i:i + width] for i in range(0, C, width)]
    outs = []
    sp = None
    for i in range(nums):
        sp = spx[i] if i == 0 else sp + spx[i]
        kern = p['conv_w'][i].reshape(3, 3, 1, width)            # (kh, kw, 1, c)
        sp = jax.lax.conv_general_dilated(
            sp, kern, window_strides=(1, 1), padding='SAME',
            dimension_numbers=('NHWC', 'HWIO', 'NHWC'),
            feature_group_count=width) + p['conv_b'][i].reshape(1, 1, 1, width)
        outs.append(sp)
    xc = jnp.concatenate(outs + [spx[nums]], axis=-1)            # (B, H, W, C)

    xt = (xc * p['bnx_s'].reshape(1, 1, 1, C)
          + p['bnx_b'].reshape(1, 1, 1, C)).reshape(B, N, C)     # norm_xca
    pos = pos_features(H, W) @ p['w_pos_t'] + p['b_pos']
    xt = xt + pos[None]

    qkv = jnp.dot(xt.astype(bf16), p['w_qkv_t'], preferred_element_type=f32) + p['b_qkv']
    qkv = qkv.reshape(B, N, 3, num_heads, hd).transpose(2, 0, 3, 4, 1)   # (3,B,h,hd,N)
    q, k, v = qkv[0], qkv[1], qkv[2]
    q = q / jnp.maximum(jnp.sqrt(jnp.sum(q * q, axis=-1, keepdims=True)), 1e-12)
    k = k / jnp.maximum(jnp.sqrt(jnp.sum(k * k, axis=-1, keepdims=True)), 1e-12)
    attn = jnp.einsum('bhdn,bhen->bhde', q.astype(bf16), k.astype(bf16),
                      preferred_element_type=f32)
    attn = jax.nn.softmax(attn * p['temp'].reshape(1, num_heads, 1, 1), axis=-1)
    xa = jnp.einsum('bhde,bhen->bhdn', attn.astype(bf16), v.astype(bf16),
                    preferred_element_type=f32)
    xa = xa.transpose(0, 3, 1, 2).reshape(B, N, C)
    xa = jnp.dot(xa.astype(bf16), p['w_proj_t'], preferred_element_type=f32) + p['b_proj']
    xt = xt + p['gamma_xca'] * xa

    xm = xt * p['bn_s'] + p['bn_b']                               # norm
    h1 = jnp.dot(xm.astype(bf16), p['w1_t'], preferred_element_type=f32) + p['b1']
    h1 = h1 * jnp.clip(h1 + 3.0, 0.0, 6.0) * (1.0 / 6.0)
    y2 = jnp.dot(h1.astype(bf16), p['w2_t'], preferred_element_type=f32) + p['b2']
    y2 = p['gamma'] * y2
    return inp + jnp.transpose(y2.reshape(B, H, W, C), (0, 3, 1, 2))


if __name__ == "__main__":
    B, dim, H, W = 2, 32, 8, 8
    num_heads = 8
    scales = 2   # scales=1 (torch default) indexes spx[1] out of range in the reference

    key = jax.random.PRNGKey(0)
    kx, kp = jax.random.split(key)
    x = jax.random.normal(kx, (B, dim, H, W), dtype=jnp.float32)
    # layer_scale=1.0 / w_std=0.1 keep the attention+MLP branch numerically visible so
    # the self-check is meaningful (forward semantics are identical for any values).
    params = init_params(kp, dim, num_heads=num_heads, scales=scales,
                         layer_scale_init_value=1.0, w_std=0.1)

    out = jax.block_until_ready(sdta_encoder_bn_hs(x, params, num_heads=num_heads))
    assert out.shape == (B, dim, H, W)
    assert bool(jnp.all(jnp.isfinite(out)))

    ref = jax.block_until_ready(reference_forward(x, params, num_heads=num_heads))
    err = float(jnp.max(jnp.abs(out - ref)))
    assert err < 5e-2, f"kernel/reference mismatch: max abs err = {err}"
    print("KERNEL_OK")
</pallas_src>

<mosaic_0001>
module attributes {stable_mosaic.version = 11 : i64} {
  func.func @_dwconv_kernel(%arg0: i32, %arg1: memref<1x8x128xf32, #tpu.memory_space<vmem>>, %arg2: memref<9x128xf32, #tpu.memory_space<vmem>>, %arg3: memref<1x128xf32, #tpu.memory_space<vmem>>, %arg4: memref<1x8x128xf32, #tpu.memory_space<vmem>>) attributes {dimension_semantics = [#tpu.dimension_semantics<parallel>], iteration_bounds = array<i64: 2>, scalar_prefetch = 0 : i64, scratch_operands = 0 : i64, tpu.core_type = #tpu.core_type<tc>, window_params = [{transform_indices = @transform_0, window_bounds = array<i64: 1, 8, 128>}, {pipeline_mode = #tpu.pipeline_mode<synchronous>, transform_indices = @transform_1, window_bounds = array<i64: 9, 128>}, {pipeline_mode = #tpu.pipeline_mode<synchronous>, transform_indices = @transform_2, window_bounds = array<i64: 1, 128>}, {transform_indices = @transform_3, window_bounds = array<i64: 1, 8, 128>}]} {
    %c0 = arith.constant 0 : index
    %c0_0 = arith.constant 0 : index
    %c0_1 = arith.constant 0 : index
    %0 = vector.load %arg1[%c0, %c0_0, %c0_1] : memref<1x8x128xf32, #tpu.memory_space<vmem>>, vector<1x8x128xf32>
    %1 = vector.shape_cast %0 : vector<1x8x128xf32> to vector<8x128xf32>
    %cst = arith.constant 0.000000e+00 : f32
    %2 = vector.broadcast %cst : f32 to vector<1x128xf32>
    %3 = tpu.concatenate %2, %1, %2 in 0 : vector<1x128xf32>, vector<8x128xf32>, vector<1x128xf32> -> vector<10x128xf32>
    %cst_2 = arith.constant 0.000000e+00 : f32
    %4 = vector.broadcast %cst_2 : f32 to vector<10x16xf32>
    %5 = vector.extract_strided_slice %3 {offsets = [0, 0], sizes = [10, 112], strides = [1, 1]} : vector<10x128xf32> to vector<10x112xf32>
    %6 = tpu.concatenate %4, %5 in 1 : vector<10x16xf32>, vector<10x112xf32> -> vector<10x128xf32>
    %7 = vector.extract_strided_slice %3 {offsets = [0, 16], sizes = [10, 112], strides = [1, 1]} : vector<10x128xf32> to vector<10x112xf32>
    %8 = tpu.concatenate %7, %4 in 1 : vector<10x112xf32>, vector<10x16xf32> -> vector<10x128xf32>
    %cst_3 = arith.constant 0.000000e+00 : f32
    %9 = vector.broadcast %cst_3 : f32 to vector<8x128xf32>
    %c0_4 = arith.constant 0 : index
    %c0_5 = arith.constant 0 : index
    %10 = vector.load %arg2[%c0_4, %c0_5] : memref<9x128xf32, #tpu.memory_space<vmem>>, vector<1x128xf32>
    %11 = vector.extract_strided_slice %6 {offsets = [0, 0], sizes = [8, 128], strides = [1, 1]} : vector<10x128xf32> to vector<8x128xf32>
    %12 = vector.broadcast %10 : vector<1x128xf32> to vector<8x128xf32>
    %13 = arith.mulf %11, %12 : vector<8x128xf32>
    %14 = arith.addf %9, %13 : vector<8x128xf32>
    %c1 = arith.constant 1 : index
    %c0_6 = arith.constant 0 : index
    %15 = vector.load %arg2[%c1, %c0_6] : memref<9x128xf32, #tpu.memory_space<vmem>>, vector<1x128xf32>
    %16 = vector.extract_strided_slice %3 {offsets = [0, 0], sizes = [8, 128], strides = [1, 1]} : vector<10x128xf32> to vector<8x128xf32>
    %17 = vector.broadcast %15 : vector<1x128xf32> to vector<8x128xf32>
    %18 = arith.mulf %16, %17 : vector<8x128xf32>
    %19 = arith.addf %14, %18 : vector<8x128xf32>
    %c2 = arith.constant 2 : index
    %c0_7 = arith.constant 0 : index
    %20 = vector.load %arg2[%c2, %c0_7] : memref<9x128xf32, #tpu.memory_space<vmem>>, vector<1x128xf32>
    %21 = vector.extract_strided_slice %8 {offsets = [0, 0], sizes = [8, 128], strides = [1, 1]} : vector<10x128xf32> to vector<8x128xf32>
    %22 = vector.broadcast %20 : vector<1x128xf32> to vector<8x128xf32>
    %23 = arith.mulf %21, %22 : vector<8x128xf32>
    %24 = arith.addf %19, %23 : vector<8x128xf32>
    %c3 = arith.constant 3 : index
    %c0_8 = arith.constant 0 : index
    %25 = vector.load %arg2[%c3, %c0_8] : memref<9x128xf32, #tpu.memory_space<vmem>>, vector<1x128xf32>
    %26 = vector.extract_strided_slice %6 {offsets = [1, 0], sizes = [8, 128], strides = [1, 1]} : vector<10x128xf32> to vector<8x128xf32>
    %27 = vector.broadcast %25 : vector<1x128xf32> to vector<8x128xf32>
    %28 = arith.mulf %26, %27 : vector<8x128xf32>
    %29 = arith.addf %24, %28 : vector<8x128xf32>
    %c4 = arith.constant 4 : index
    %c0_9 = arith.constant 0 : index
    %30 = vector.load %arg2[%c4, %c0_9] : memref<9x128xf32, #tpu.memory_space<vmem>>, vector<1x128xf32>
    %31 = vector.extract_strided_slice %3 {offsets = [1, 0], sizes = [8, 128], strides = [1, 1]} : vector<10x128xf32> to vector<8x128xf32>
    %32 = vector.broadcast %30 : vector<1x128xf32> to vector<8x128xf32>
    %33 = arith.mulf %31, %32 : vector<8x128xf32>
    %34 = arith.addf %29, %33 : vector<8x128xf32>
    %c5 = arith.constant 5 : index
    %c0_10 = arith.constant 0 : index
    %35 = vector.load %arg2[%c5, %c0_10] : memref<9x128xf32, #tpu.memory_space<vmem>>, vector<1x128xf32>
    %36 = vector.extract_strided_slice %8 {offsets = [1, 0], sizes = [8, 128], strides = [1, 1]} : vector<10x128xf32> to vector<8x128xf32>
    %37 = vector.broadcast %35 : vector<1x128xf32> to vector<8x128xf32>
    %38 = arith.mulf %36, %37 : vector<8x128xf32>
    %39 = arith.addf %34, %38 : vector<8x128xf32>
    %c6 = arith.constant 6 : index
    %c0_11 = arith.constant 0 : index
    %40 = vector.load %arg2[%c6, %c0_11] : memref<9x128xf32, #tpu.memory_space<vmem>>, vector<1x128xf32>
    %41 = vector.extract_strided_slice %6 {offsets = [2, 0], sizes = [8, 128], strides = [1, 1]} : vector<10x128xf32> to vector<8x128xf32>
    %42 = vector.broadcast %40 : vector<1x128xf32> to vector<8x128xf32>
    %43 = arith.mulf %41, %42 : vector<8x128xf32>
    %44 = arith.addf %39, %43 : vector<8x128xf32>
    %c7 = arith.constant 7 : index
    %c0_12 = arith.constant 0 : index
    %45 = vector.load %arg2[%c7, %c0_12] : memref<9x128xf32, #tpu.memory_space<vmem>>, vector<1x128xf32>
    %46 = vector.extract_strided_slice %3 {offsets = [2, 0], sizes = [8, 128], strides = [1, 1]} : vector<10x128xf32> to vector<8x128xf32>
    %47 = vector.broadcast %45 : vector<1x128xf32> to vector<8x128xf32>
    %48 = arith.mulf %46, %47 : vector<8x128xf32>
    %49 = arith.addf %44, %48 : vector<8x128xf32>
    %c8 = arith.constant 8 : index
    %c0_13 = arith.constant 0 : index
    %50 = vector.load %arg2[%c8, %c0_13] : memref<9x128xf32, #tpu.memory_space<vmem>>, vector<1x128xf32>
    %51 = vector.extract_strided_slice %8 {offsets = [2, 0], sizes = [8, 128], strides = [1, 1]} : vector<10x128xf32> to vector<8x128xf32>
    %52 = vector.broadcast %50 : vector<1x128xf32> to vector<8x128xf32>
    %53 = arith.mulf %51, %52 : vector<8x128xf32>
    %54 = arith.addf %49, %53 : vector<8x128xf32>
    %c0_14 = arith.constant 0 : index
    %c0_15 = arith.constant 0 : index
    %55 = vector.load %arg3[%c0_14, %c0_15] : memref<1x128xf32, #tpu.memory_space<vmem>>, vector<1x128xf32>
    %56 = vector.broadcast %55 : vector<1x128xf32> to vector<8x128xf32>
    %57 = arith.addf %54, %56 : vector<8x128xf32>
    %c0_16 = arith.constant 0 : index
    %c0_17 = arith.constant 0 : index
    %c0_18 = arith.constant 0 : index
    %58 = vector.load %arg4[%c0_16, %c0_17, %c0_18] : memref<1x8x128xf32, #tpu.memory_space<vmem>>, vector<1x8x128xf32>
    %59 = vector.shape_cast %58 : vector<1x8x128xf32> to vector<8x128xf32>
    %60 = vector.shape_cast %57 : vector<8x128xf32> to vector<1x8x128xf32>
    tpu.vector_store %arg4[%c0_16, %c0_17, %c0_18], %60 {strides = array<i32>} : memref<1x8x128xf32, #tpu.memory_space<vmem>>, vector<1x8x128xf32>,
    return
  }
  func.func @transform_0(%arg0: i32) -> (i32, i32, i32) {
    %c0_i32 = arith.constant 0 : i32
    %c0_i32_0 = arith.constant 0 : i32
    %c0_i32_1 = arith.constant 0 : i32
    return %arg0, %c0_i32, %c0_i32_0 : i32, i32, i32
  }
  func.func @transform_1(%arg0: i32) -> (i32, i32) {
    %c0_i32 = arith.constant 0 : i32
    %c0_i32_0 = arith.constant 0 : i32
    %c0_i32_1 = arith.constant 0 : i32
    return %c0_i32, %c0_i32_0 : i32, i32
  }
  func.func @transform_2(%arg0: i32) -> (i32, i32) {
    %c0_i32 = arith.constant 0 : i32
    %c0_i32_0 = arith.constant 0 : i32
    %c0_i32_1 = arith.constant 0 : i32
    return %c0_i32, %c0_i32_0 : i32, i32
  }
  func.func @transform_3(%arg0: i32) -> (i32, i32, i32) {
    %c0_i32 = arith.constant 0 : i32
    %c0_i32_0 = arith.constant 0 : i32
    %c0_i32_1 = arith.constant 0 : i32
    return %arg0, %c0_i32, %c0_i32_0 : i32, i32, i32
  }
}

</mosaic_0001>

<llo_original>
// kernel: tpu_custom_call.1
$region0: #{tpu_custom_call.1}
  #allocation0 [shape = 'u32[]', space=smem, size = 0x4, offset = 0x4, fixed_abs, tag = 'smem constant byte address 0x4 - core index']
  #allocation1 [shape = 'u32[72,128]{1,0:T(1,128)}', space=vmem, size = 0x9000, scoped, tag = 'internal scratch']
  %s0 = inlined_call_operand.hbm [shape: f32[2,8,128], index: 0, kind: input, shape index: {}]
  %s1 = inlined_call_operand.hbm [shape: f32[9,128], index: 1, kind: input, shape index: {}]
  %s2 = inlined_call_operand.vmem [shape: f32[1,128], index: 2, kind: input, shape index: {}]
  %s3 = inlined_call_operand.hbm [shape: f32[2,8,128], index: 3, kind: output, shape index: {}]
  %s4 = sld [smem:[#allocation0]]
  $region53: #{tpu_custom_call.1} parent=0
    _
  %s6 = ssub.s32 1, %s4
  %s7 = scalar_select 0, %s6, %s4
  $region1: #{tpu_custom_call.1} parent=0
    #allocation2 [shape = 'u8[8192]{0}', space=vmem, size = 0x2000, scoped, tag = 'input window, operand 0']
    #allocation3 [shape = 's32[2]{0}', space=sflag, size = 0x8, scoped, tag = 'scoped memory for tpu_custom_call.1']
    #allocation4 [shape = 's32[2]{0}', space=sflag, size = 0x8, scoped, tag = 'scoped memory for tpu_custom_call.1']
    #allocation5 [shape = 'u8[8192]{0}', space=vmem, size = 0x2000, scoped, tag = 'input window, operand 1, single buffered']
    #allocation6 [shape = 's32[1]{0}', space=sflag, size = 0x4, scoped, tag = 'scoped memory for tpu_custom_call.1']
    #allocation7 [shape = 'u8[8192]{0}', space=vmem, size = 0x2000, scoped, tag = 'output window, operand 0']
    %8 = vsyncpa [#allocation3], 0
    %s9 = scalar_lea.sflag [#allocation3], 1
    %10 = vsyncpa %s9, 0
    %11 = vsyncpa [#allocation6], 0
    %12 = vsyncpa [#allocation4], 0
    %s13 = scalar_lea.sflag [#allocation4], 1
    %14 = vsyncpa %s13, 0
    loop: start=0, step=1, limit=4
    $region2: #{tpu_custom_call.1} parent=1 // loop_pre_header
      _
    $region3: #{tpu_custom_call.1} parent=1 // loop_header
      %s16 = sphi 0, %s20
      %p17 = scmp.ge.s32.totalorder %s16, 4
      %s26 = sphi 0, %s28
      %s29 = sphi 0, %s26
      %s30 = sphi 0, %s29
      %s46 = sphi 0, %s30
      %s50 = sphi 0, %s50
      %s52 = sphi 0, %s50
      %s53 = sphi 0, %s52
      %s67 = sphi 0, %s53
      %s71 = sphi 0, %s71
      %s73 = sphi 0, %s71
      %s74 = sphi 0, %s73
      %s88 = sphi 0, %s74
      %s94 = sphi 0, %s96
      %s97 = sphi 0, %s94
      %s98 = sphi 0, %s97
      %s114 = sphi 0, %s98
    $region4: #{tpu_custom_call.1} parent=1 // loop_header_branch
      %19 = sbr.rel (%p17) target = $region8
    $region5: #{tpu_custom_call.1} parent=1 // loop_body
      %s21 = ssub.s32 %s16, 1
      %s22 = ssub.s32 %s16, 2
      %s23 = sadd.s32 %s16, 1
      %s24 = ssub.s32 %s16, %s23
      %p25 = scmp.eq.s32.totalorder %s24, 0
      %s27 = sadd.s32 %s26, 1
      %s28 = scalar_select %p25, %s26, %s27
      %p31 = pneg %p25
      %p32 = scmp.eq.s32.totalorder %s16, 1
      %p33 = por %p31, %p32
      %p34 = scmp.ne.s32.totalorder %s26, %s29
      %p35 = scmp.eq.s32.totalorder %s16, 0
      %p36 = por %p34, %p35
      %p37 = scmp.ne.s32.totalorder %s26, %s29
      %p38 = scmp.eq.s32.totalorder %s21, 1
      %p39 = por %p37, %p38
      %p40 = scmp.ne.s32.totalorder %s29, %s30
      %p41 = scmp.eq.s32.totalorder %s21, 0
      %p42 = por %p40, %p41
      %p43 = scmp.ne.s32.totalorder %s29, %s30
      %p44 = scmp.eq.s32.totalorder %s22, 1
      %p45 = por %p43, %p44
      %p47 = scmp.ne.s32.totalorder %s30, %s46
      %p48 = scmp.eq.s32.totalorder %s22, 0
      %p49 = por %p47, %p48
      %s51 = sadd.s32 %s50, 1
      %p54 = scmp.eq.s32.totalorder %s16, 1
      %p55 = scmp.ne.s32.totalorder %s50, %s52
      %p56 = scmp.eq.s32.totalorder %s16, 0
      %p57 = por %p55, %p56
      %p58 = scmp.ne.s32.totalorder %s50, %s52
      %p59 = scmp.eq.s32.totalorder %s21, 1
      %p60 = por %p58, %p59
      %p61 = scmp.ne.s32.totalorder %s52, %s53
      %p62 = scmp.eq.s32.totalorder %s21, 0
      %p63 = por %p61, %p62
      %p64 = scmp.ne.s32.totalorder %s52, %s53
      %p65 = scmp.eq.s32.totalorder %s22, 1
      %p66 = por %p64, %p65
      %p68 = scmp.ne.s32.totalorder %s53, %s67
      %p69 = scmp.eq.s32.totalorder %s22, 0
      %p70 = por %p68, %p69
      %s72 = sadd.s32 %s71, 1
      %p75 = scmp.eq.s32.totalorder %s16, 1
      %p76 = scmp.ne.s32.totalorder %s71, %s73
      %p77 = scmp.eq.s32.totalorder %s16, 0
      %p78 = por %p76, %p77
      %p79 = scmp.ne.s32.totalorder %s71, %s73
      %p80 = scmp.eq.s32.totalorder %s21, 1
      %p81 = por %p79, %p80
      %p82 = scmp.ne.s32.totalorder %s73, %s74
      %p83 = scmp.eq.s32.totalorder %s21, 0
      %p84 = por %p82, %p83
      %p85 = scmp.ne.s32.totalorder %s73, %s74
      %p86 = scmp.eq.s32.totalorder %s22, 1
      %p87 = por %p85, %p86
      %p89 = scmp.ne.s32.totalorder %s74, %s88
      %p90 = scmp.eq.s32.totalorder %s22, 0
      %p91 = por %p89, %p90
      %s92 = ssub.s32 %s16, %s23
      %p93 = scmp.eq.s32.totalorder %s92, 0
      %s95 = sadd.s32 %s94, 1
      %s96 = scalar_select %p93, %s94, %s95
      %p99 = pneg %p93
      %p100 = scmp.eq.s32.totalorder %s16, 1
      %p101 = por %p99, %p100
      %p102 = scmp.ne.s32.totalorder %s94, %s97
      %p103 = scmp.eq.s32.totalorder %s16, 0
      %p104 = por %p102, %p103
      %p105 = scmp.ne.s32.totalorder %s94, %s97
      %p106 = scmp.eq.s32.totalorder %s21, 1
      %p107 = por %p105, %p106
      %p108 = scmp.ne.s32.totalorder %s97, %s98
      %p109 = scmp.eq.s32.totalorder %s21, 0
      %p110 = por %p108, %p109
      %p111 = scmp.ne.s32.totalorder %s97, %s98
      %p112 = scmp.eq.s32.totalorder %s22, 1
      %p113 = por %p111, %p112
      %p115 = scmp.ne.s32.totalorder %s98, %s114
      %p116 = scmp.eq.s32.totalorder %s22, 0
      %p117 = por %p115, %p116
      %p118 = scmp.le.s32.totalorder 1, %s16
      %p119 = scmp.lt.s32.totalorder %s16, 3
      %p120 = pnand %p118, %p119
      %p121 = pneg %p120
      // Predicated region
      $region9: #{tpu_custom_call.1} parent=5 // pred_check
        _
      $region10: #{tpu_custom_call.1} parent=5 // pred_check_branch
        %123 = sbr.rel (%p120) target = $region12
      $region11: #{tpu_custom_call.1} parent=5 // pred_region
        %s124 = ssub.s32 %s16, 1
        // Predicated region
        $region13: #{tpu_custom_call.1} parent=11 // pred_check
          %p125 = pneg %p63
        $region14: #{tpu_custom_call.1} parent=11 // pred_check_branch
          %127 = sbr.rel (%p125) target = $region16
        $region15: #{tpu_custom_call.1} parent=11 // pred_region
          %129 = vsyncadd [#allocation6], 0
          %s130 = sshll.u32 %s1, 4
          %s131 = int_to_ptr.hbm [resolvable:$true] %s130
          %s132 = sshll.u32 [#allocation5], 4
          %s133 = int_to_ptr.vmem [resolvable:$true] %s132
          %138 = dma.hbm_to_vmem [thread:$0]  %s131, 256, %s133, [#allocation6], 128, 128, 8
        $region16: #{tpu_custom_call.1} parent=11 // pred_fallthru
          _
        // Predicated region
        $region17: #{tpu_custom_call.1} parent=11 // pred_check
          %p139 = pneg %p84
        $region18: #{tpu_custom_call.1} parent=11 // pred_check_branch
          %141 = sbr.rel (%p139) target = $region20
        $region19: #{tpu_custom_call.1} parent=11 // pred_region
          _
        $region20: #{tpu_custom_call.1} parent=11 // pred_fallthru
          _
      $region12: #{tpu_custom_call.1} parent=5 // pred_fallthru
        _
      %p142 = scmp.lt.s32.totalorder %s16, 2
      // Predicated region
      $region21: #{tpu_custom_call.1} parent=5 // pred_check
        %p143 = pneg %p142
      $region22: #{tpu_custom_call.1} parent=5 // pred_check_branch
        %145 = sbr.rel (%p143) target = $region24
      $region23: #{tpu_custom_call.1} parent=5 // pred_region
        // Predicated region
        $region25: #{tpu_custom_call.1} parent=23 // pred_check
          %p146 = pneg %p36
        $region26: #{tpu_custom_call.1} parent=23 // pred_check_branch
          %148 = sbr.rel (%p146) target = $region28
        $region27: #{tpu_custom_call.1} parent=23 // pred_region
          %s149 = sand.u32 %s26, 1
          %s150 = scalar_lea.sflag [#allocation3], %s149
          %s151 = sand.u32 %s26, 1
          %s152 = smul.addr %s151, 8
          %s153 = scalar_lea.vmem [#allocation2], %s152
          %155 = vsyncadd %s150, 0
          %s156 = smul.addr %s16, 8
          %s157 = scalar_lea.hbm %s0, %s156
          %s159 = sshll.u32 %s157, 4
          %s160 = int_to_ptr.hbm [resolvable:$true] %s159
          %s161 = sshll.u32 %s153, 4
          %s162 = int_to_ptr.vmem [resolvable:$true] %s161
          %164 = dma.hbm_to_vmem [thread:$0]  %s160, 128, %s162, %s150
        $region28: #{tpu_custom_call.1} parent=23 // pred_fallthru
          _
      $region24: #{tpu_custom_call.1} parent=5 // pred_fallthru
        _
      %p165 = scmp.le.s32.totalorder 1, %s16
      %p166 = scmp.lt.s32.totalorder %s16, 3
      %p167 = pnand %p165, %p166
      %p168 = pneg %p167
      // Predicated region
      $region29: #{tpu_custom_call.1} parent=5 // pred_check
        _
      $region30: #{tpu_custom_call.1} parent=5 // pred_check_branch
        %170 = sbr.rel (%p167) target = $region32
      $region31: #{tpu_custom_call.1} parent=5 // pred_region
        %s171 = ssub.s32 %s16, 1
        %s172 = sand.u32 %s29, 1
        %s173 = scalar_lea.sflag [#allocation3], %s172
        %s174 = sand.u32 %s29, 1
        %s175 = smul.addr %s174, 8
        %s176 = scalar_lea.vmem [#allocation2], %s175
        // Predicated region
        $region33: #{tpu_custom_call.1} parent=31 // pred_check
          %p177 = pneg %p42
        $region34: #{tpu_custom_call.1} parent=31 // pred_check_branch
          %179 = sbr.rel (%p177) target = $region36
        $region35: #{tpu_custom_call.1} parent=31 // pred_region
          %181 = dma.done %s173, 128
        $region36: #{tpu_custom_call.1} parent=31 // pred_fallthru
          _
        // Predicated region
        $region37: #{tpu_custom_call.1} parent=31 // pred_check
          %p182 = pneg %p63
        $region38: #{tpu_custom_call.1} parent=31 // pred_check_branch
          %184 = sbr.rel (%p182) target = $region40
        $region39: #{tpu_custom_call.1} parent=31 // pred_region
          %186 = dma.done [#allocation6], 256
        $region40: #{tpu_custom_call.1} parent=31 // pred_fallthru
          _
        %s187 = sand.u32 %s29, 1
        %s188 = scalar_lea.sflag [#allocation3], %s187
        %s189 = sand.u32 %s29, 1
        %s190 = smul.addr %s189, 8
        %s191 = scalar_lea.vmem [#allocation2], %s190
        %p192 = pneg %p42
        %p193 = pneg %p39
        %p194 = pneg %p63
        %p195 = pneg %p60
        %p196 = pneg %p84
        %p197 = pneg %p81
        %p198 = pneg %p110
        %p199 = pneg %p107
        %s200 = sand.u32 %s97, 1
        %s201 = scalar_lea.sflag [#allocation4], %s200
        %s202 = sand.u32 %s97, 1
        %s203 = smul.addr %s202, 8
        %s204 = scalar_lea.vmem [#allocation7], %s203
        %v205 = vld [vmem:[%s176] sm:$0xff]
        %v207 = vrot.slane %v205, 7
        %vm209 = vcmask 1040384
        %v210 = vsel %vm209, 0.0, %v207
        %v211 = vsel %vm209, %v207, 0.0
        %214 = vrot.lane.b32.xlu0 %v210, 16
        %v215 = vpop.permute.xlu0 %214
        %216 = vrot.lane.b32.xlu0 %v211, 16
        %v217 = vpop.permute.xlu0 %216
        %vm220 = vcmask 130048
        %v221 = vsel %vm220, 0.0, %v215
        %v222 = vsel %vm220, 0.0, %v217
        %223 = vrot.lane.b32.xlu0 %v210, 112
        %v224 = vpop.permute.xlu0 %223
        %225 = vrot.lane.b32.xlu0 %v211, 112
        %v226 = vpop.permute.xlu0 %225
        %vm229 = vcmask 916480
        %v230 = vsel %vm229, %v224, 0.0
        %v231 = vsel %vm229, %v226, 0.0
        %v232 = vld [vmem:[#allocation5] sm:$0x1]
        %v233 = vperm.slane %v232, 0
        %v234 = vmul.f32 %v221, %v233
        %v235 = vadd.f32 %v234, 0.0
        %v236 = vld [vmem:[#allocation5 + $0x1] sm:$0x1]
        %v237 = vperm.slane %v236, 0
        %v238 = vmul.f32 %v210, %v237
        %v239 = vadd.f32 %v235, %v238
        %v240 = vld [vmem:[#allocation5 + $0x2] sm:$0x1]
        %v241 = vperm.slane %v240, 0
        %v242 = vmul.f32 %v230, %v241
        %v243 = vadd.f32 %v239, %v242
        %v244 = vld [vmem:[#allocation5 + $0x3] sm:$0x1]
        %v245 = vperm.slane %v244, 0
        %v246 = vmul.f32 %v221, %v245
        %v247 = vmul.f32 %v222, %v245
        %vm250 = vcmask 1046528
        %v251 = vrot.slane %v246, 1
        %v252 = vrot.slane %v247, 1
        %v253 = vsel %vm250, %v251, %v252
        %v255 = vadd.f32 %v243, %v253
        %v256 = vld [vmem:[#allocation5 + $0x4] sm:$0x1]
        %v257 = vperm.slane %v256, 0
        %v258 = vmul.f32 %v210, %v257
        %v259 = vmul.f32 %v211, %v257
        %v262 = vrot.slane %v258, 1
        %v263 = vrot.slane %v259, 1
        %v264 = vsel %vm250, %v262, %v263
        %v266 = vadd.f32 %v255, %v264
        %v267 = vld [vmem:[#allocation5 + $0x5] sm:$0x1]
        %v268 = vperm.slane %v267, 0
        %v269 = vmul.f32 %v230, %v268
        %v270 = vmul.f32 %v231, %v268
        %v273 = vrot.slane %v269, 1
        %v274 = vrot.slane %v270, 1
        %v275 = vsel %vm250, %v273, %v274
        %v277 = vadd.f32 %v266, %v275
        %v278 = vld [vmem:[#allocation5 + $0x6] sm:$0x1]
        %v279 = vperm.slane %v278, 0
        %v280 = vmul.f32 %v221, %v279
        %v281 = vmul.f32 %v222, %v279
        %vm284 = vcmask 1045504
        %v285 = vrot.slane %v280, 2
        %v286 = vrot.slane %v281, 2
        %v287 = vsel %vm284, %v285, %v286
        %v289 = vadd.f32 %v277, %v287
        %v290 = vld [vmem:[#allocation5 + $0x7] sm:$0x1]
        %v291 = vperm.slane %v290, 0
        %v292 = vmul.f32 %v210, %v291
        %v293 = vmul.f32 %v211, %v291
        %v296 = vrot.slane %v292, 2
        %v297 = vrot.slane %v293, 2
        %v298 = vsel %vm284, %v296, %v297
        %v300 = vadd.f32 %v289, %v298
        %v301 = vld [vmem:[#allocation5 + $0x8] sm:$0x1]
        %v302 = vperm.slane %v301, 0
        %v303 = vmul.f32 %v230, %v302
        %v304 = vmul.f32 %v231, %v302
        %v307 = vrot.slane %v303, 2
        %v308 = vrot.slane %v304, 2
        %v309 = vsel %vm284, %v307, %v308
        %v311 = vadd.f32 %v300, %v309
        %v312 = vld [vmem:[%s2] sm:$0x1]
        %v314 = vperm.slane %v312, 0
        %v316 = vadd.f32 %v311, %v314
        %317 = vst [vmem:[%s204] sm:$0xff] %v316
        %s318 = sand.u32 %s97, 1
        %s319 = scalar_lea.sflag [#allocation4], %s318
        %s320 = sand.u32 %s97, 1
        %s321 = smul.addr %s320, 8
        %s322 = scalar_lea.vmem [#allocation7], %s321
        // Predicated region
        $region41: #{tpu_custom_call.1} parent=31 // pred_check
          %p323 = pneg %p107
        $region42: #{tpu_custom_call.1} parent=31 // pred_check_branch
          %325 = sbr.rel (%p323) target = $region44
        $region43: #{tpu_custom_call.1} parent=31 // pred_region
          %327 = vsyncadd %s319, 0
          %s328 = smul.addr %s21, 8
          %s329 = scalar_lea.hbm %s3, %s328
          %s331 = sshll.u32 %s322, 4
          %s332 = int_to_ptr.vmem [resolvable:$true] %s331
          %s333 = sshll.u32 %s329, 4
          %s334 = int_to_ptr.hbm [resolvable:$true] %s333
          %336 = dma.vmem_to_hbm [thread:$0]  %s332, 128, %s334, %s319
        $region44: #{tpu_custom_call.1} parent=31 // pred_fallthru
          _
      $region32: #{tpu_custom_call.1} parent=5 // pred_fallthru
        _
      %p337 = scmp.le.s32.totalorder 2, %s16
      // Predicated region
      $region45: #{tpu_custom_call.1} parent=5 // pred_check
        %p338 = pneg %p337
      $region46: #{tpu_custom_call.1} parent=5 // pred_check_branch
        %340 = sbr.rel (%p338) target = $region48
      $region47: #{tpu_custom_call.1} parent=5 // pred_region
        %s341 = ssub.s32 %s16, 2
        // Predicated region
        $region49: #{tpu_custom_call.1} parent=47 // pred_check
          %p342 = pneg %p113
        $region50: #{tpu_custom_call.1} parent=47 // pred_check_branch
          %344 = sbr.rel (%p342) target = $region52
        $region51: #{tpu_custom_call.1} parent=47 // pred_region
          %s345 = sand.u32 %s98, 1
          %s346 = scalar_lea.sflag [#allocation4], %s345
          %s347 = sand.u32 %s98, 1
          %s348 = smul.addr %s347, 8
          %s349 = scalar_lea.vmem [#allocation7], %s348
          %351 = dma.done %s346, 128
        $region52: #{tpu_custom_call.1} parent=47 // pred_fallthru
          _
      $region48: #{tpu_custom_call.1} parent=5 // pred_fallthru
        _
    $region6: #{tpu_custom_call.1} parent=1 // loop_footer
      %s20 = sadd.s32 1, %s16
    $region7: #{tpu_custom_call.1} parent=1 // loop_footer_branch
      %15 = sbr.rel target = $region3
    $region8: #{tpu_custom_call.1} parent=1 // loop_exit
      _
    %352 = vsyncpa [#allocation3], 1
    %s353 = scalar_lea.sflag [#allocation3], 1
    %354 = vsyncpa %s353, 1
    %355 = vsyncpa [#allocation6], 1
    %356 = vsyncpa [#allocation4], 1
    %s357 = scalar_lea.sflag [#allocation4], 1
    %358 = vsyncpa %s357, 1

</llo_original>
